<compile_context>
chip_gen: v5e
topology: v5e:2x2
jax: 0.10.0
libtpu: 0.0.40
codegen_flags: <defaults>
</compile_context>

<pallas_src>
import math

import numpy as np
import jax
import jax.numpy as jnp
from jax.experimental import pallas as pl
from jax.experimental.pallas import tpu as pltpu

# ---- small, module-consistent config -------------------------------------
CORPUS_SIZE = 64
INPUT_EMB_DIMS = (16, 16)        # user-side embedding dims (sum -> tower input)
ITEM_EMB_DIM = 32                # equals layer_nodes[-1] so the dot product works
LAYER_NODES = (64, 32)           # user tower MLP widths
TEMPERATURE = 1.0
BATCH = 8
NUM_NEG = 4


# ---- Pallas kernel: gathers + user MLP + scoring + loss --------------------
def onetower_loss_kernel(idx_ref, sgn_ref, t0_ref, t1_ref, it_ref,
                         w1_ref, b1_ref, w2_ref, b2_ref, loss_ref):
    B, R = sgn_ref.shape           # R = B * (1 + N); columns 0..B-1 are positives

    def onehot_gather(idx, table_ref):
        # Row gather as one-hot @ table: exact, fully fused, MXU-only.
        # Indices are assumed in-range; an out-of-range id would silently
        # select an all-zero embedding row.
        rows = idx.shape[0]
        corpus = table_ref.shape[0]
        lane_ids = jax.lax.broadcasted_iota(jnp.int32, (rows, corpus), 1)
        onehot = (lane_ids == idx).astype(jnp.float32)          # [rows, corpus]
        return jnp.dot(onehot, table_ref[...],
                       preferred_element_type=jnp.float32)       # [rows, dim]

    # Packed index layout: rows [0, B) = user feature 0, [B, 2B) = user
    # feature 1, [2B, 2B+R) = positive item ids followed by flattened
    # negatives. All slice starts/lengths are multiples of 8 (free views).
    f0 = onehot_gather(idx_ref[0:B, :], t0_ref)                  # [B, d0]
    f1 = onehot_gather(idx_ref[B:2 * B, :], t1_ref)              # [B, d1]
    items = onehot_gather(idx_ref[2 * B:2 * B + R, :], it_ref)   # [R, D]

    # user tower: Linear -> ReLU -> Linear (relu=True, last_layer_relu=False).
    # hstack(f0, f1) @ W1 is done as two matmuls on static sublane slices of
    # W1 so no lane-concatenate is needed.
    d0 = t0_ref.shape[1]
    d1 = t1_ref.shape[1]
    h = (jnp.dot(f0, w1_ref[0:d0, :], preferred_element_type=jnp.float32)
         + jnp.dot(f1, w1_ref[d0:d0 + d1, :], preferred_element_type=jnp.float32)
         + b1_ref[...])
    h = jnp.maximum(h, 0.0)
    emb_user = (jnp.dot(h, w2_ref[...], preferred_element_type=jnp.float32)
                + b2_ref[...])                                   # [B, D]

    # All pos + neg scores in one MXU contraction on the shared last dim;
    # dot_general((1),(1)) lets Mosaic feed the transposed operand directly
    # into the MXU instead of materializing items.T via the XLU.
    scores = jax.lax.dot_general(
        emb_user, items,
        dimension_numbers=(((1,), (1,)), ((), ())),
        preferred_element_type=jnp.float32)                      # [B, R]
    scores = jnp.clip(scores * (1.0 / TEMPERATURE), -10.0, 10.0)  # clamp=True

    # Precomputed ownership/sign mask (constant under jit):
    #   -1 -> kept positive, +1 -> kept negative, 0 -> not owned by this row.
    # -logsigmoid(s) = log1p(exp(-s)); -logsigmoid(-s) = log1p(exp(s)); |s|<=10
    sgn = sgn_ref[...]
    elem = jnp.log1p(jnp.exp(sgn * scores))
    loss_ref[0, 0] = jnp.sum(jnp.where(sgn != 0.0, elem, 0.0)) * (1.0 / B)


def _sign_keep_mask(batch, num_neg):
    # Static: column j < B is the positive item of batch j; column j >= B is
    # negative (j - B) % N of batch (j - B) // N. Built with numpy at trace
    # time so it constant-folds under jit (no per-call VPU iota/compare/div).
    r = batch * (1 + num_neg)
    col = np.arange(r)[None, :]
    row = np.arange(batch)[:, None]
    is_pos = col < batch
    owner = np.where(is_pos, col, (col - batch) // max(num_neg, 1))
    keep = (owner == row)
    sgn = np.where(is_pos, -1.0, 1.0) * keep
    return jnp.asarray(sgn, dtype=jnp.float32)


@jax.jit
def onetower_forward(params, pos_input, pos_item, neg_item):
    B = pos_item.shape[0]
    N = neg_item.shape[1]          # derived from the argument shape
    R = B * (1 + N)

    # One packed int32 index tensor -> a single tiny DMA instead of three.
    idx_packed = jnp.concatenate([
        pos_input[0].astype(jnp.int32),
        pos_input[1].astype(jnp.int32),
        pos_item.astype(jnp.int32),
        neg_item.astype(jnp.int32).reshape(B * N),
    ]).reshape(2 * B + R, 1)

    sgn = _sign_keep_mask(B, N)    # [B, R] constant

    vspec = pl.BlockSpec(memory_space=pltpu.MemorySpace.VMEM)
    loss = pl.pallas_call(
        onetower_loss_kernel,
        out_shape=jax.ShapeDtypeStruct((1, 1), jnp.float32),
        in_specs=[vspec] * 9,
        out_specs=pl.BlockSpec(memory_space=pltpu.MemorySpace.SMEM),
    )(idx_packed, sgn,
      params["input_emb"][0], params["input_emb"][1], params["item_emb"],
      params["w1"], params["b1"], params["w2"], params["b2"])
    return loss[0, 0]


# ---- deterministic parameter init (mirrors OneTower.__init__) --------------
def init_params(key):
    keys = jax.random.split(key, 8)
    input_emb = []
    for i, ied in enumerate(INPUT_EMB_DIMS):
        r = 1.0 / ied                                   # init.uniform_(-1/ied, 1/ied)
        input_emb.append(
            jax.random.uniform(keys[i], (CORPUS_SIZE, ied), jnp.float32, -r, r))
    r = 1.0 / ITEM_EMB_DIM                              # item_initrange
    item_emb = jax.random.uniform(keys[2], (CORPUS_SIZE, ITEM_EMB_DIM),
                                  jnp.float32, -r, r)

    d_in = sum(INPUT_EMB_DIMS)
    h1, h2 = LAYER_NODES
    lim1 = 1.0 / math.sqrt(d_in)                        # torch Linear default-ish
    w1 = jax.random.uniform(keys[3], (d_in, h1), jnp.float32, -lim1, lim1)
    b1 = jnp.zeros((1, h1), jnp.float32)                # init.zeros_(bias)
    lim2 = 1.0 / math.sqrt(h1)
    w2 = jax.random.uniform(keys[4], (h1, h2), jnp.float32, -lim2, lim2)
    b2 = jnp.zeros((1, h2), jnp.float32)
    return dict(input_emb=input_emb, item_emb=item_emb,
                w1=w1, b1=b1, w2=w2, b2=b2)


# ---- pure-JAX reference for a correctness check ----------------------------
def reference_forward(params, pos_input, pos_item, neg_item):
    user_feats = jnp.concatenate(
        [tab[idx] for tab, idx in zip(params["input_emb"], pos_input)], axis=-1)
    h = jnp.maximum(user_feats @ params["w1"] + params["b1"], 0.0)
    emb_user = h @ params["w2"] + params["b2"]
    emb_item = params["item_emb"][pos_item]
    emb_neg = params["item_emb"][neg_item]
    score = jnp.clip(jnp.sum(emb_user * emb_item, axis=1) / TEMPERATURE, -10., 10.)
    pos_loss = jnp.log1p(jnp.exp(-score))
    neg_score = jnp.clip(
        jnp.einsum("bnd,bd->bn", emb_neg, emb_user) / TEMPERATURE, -10., 10.)
    neg_loss = jnp.sum(jnp.log1p(jnp.exp(neg_score)), axis=1)
    return jnp.mean(pos_loss + neg_loss)


if __name__ == "__main__":
    key = jax.random.PRNGKey(0)
    pk, k1, k2, k3, k4 = jax.random.split(key, 5)
    params = init_params(pk)

    pos_input = [jax.random.randint(k1, (BATCH,), 0, CORPUS_SIZE),
                 jax.random.randint(k2, (BATCH,), 0, CORPUS_SIZE)]
    pos_item = jax.random.randint(k3, (BATCH,), 0, CORPUS_SIZE)
    neg_item = jax.random.randint(k4, (BATCH, NUM_NEG), 0, CORPUS_SIZE)

    loss = jax.block_until_ready(
        onetower_forward(params, pos_input, pos_item, neg_item))

    ref = reference_forward(params, pos_input, pos_item, neg_item)
    # tolerance accounts for MXU f32 accumulation order vs. XLA VPU reductions
    assert jnp.allclose(loss, ref, atol=1e-4, rtol=1e-4), (loss, ref)
    print("KERNEL_OK")
</pallas_src>

<mosaic_0001>
module attributes {stable_mosaic.version = 11 : i64} {
  func.func @onetower_loss_kernel(%arg0: memref<56x1xi32, #tpu.memory_space<vmem>>, %arg1: memref<8x40xf32, #tpu.memory_space<vmem>>, %arg2: memref<64x16xf32, #tpu.memory_space<vmem>>, %arg3: memref<64x16xf32, #tpu.memory_space<vmem>>, %arg4: memref<64x32xf32, #tpu.memory_space<vmem>>, %arg5: memref<32x64xf32, #tpu.memory_space<vmem>>, %arg6: memref<1x64xf32, #tpu.memory_space<vmem>>, %arg7: memref<64x32xf32, #tpu.memory_space<vmem>>, %arg8: memref<1x32xf32, #tpu.memory_space<vmem>>, %arg9: memref<1x1xf32, #tpu.memory_space<smem>>) attributes {dimension_semantics = [], scalar_prefetch = 0 : i64, scratch_operands = 0 : i64, tpu.core_type = #tpu.core_type<tc>} {
    %c0 = arith.constant 0 : index
    %c0_0 = arith.constant 0 : index
    %0 = vector.load %arg0[%c0, %c0_0] : memref<56x1xi32, #tpu.memory_space<vmem>>, vector<8x1xi32>
    %1 = tpu.iota {dimensions = array<i32: 1>} : vector<8x64xi32>
    %2 = vector.broadcast %0 : vector<8x1xi32> to vector<8x64xi32>
    %3 = arith.cmpi eq, %1, %2 : vector<8x64xi32>
    %4 = arith.extui %3 : vector<8x64xi1> to vector<8x64xi32>
    %5 = arith.sitofp %4 : vector<8x64xi32> to vector<8x64xf32>
    %c0_1 = arith.constant 0 : index
    %c0_2 = arith.constant 0 : index
    %6 = vector.load %arg2[%c0_1, %c0_2] : memref<64x16xf32, #tpu.memory_space<vmem>>, vector<64x16xf32>
    %cst = arith.constant dense<0.000000e+00> : vector<8x16xf32>
    %7 = tpu.matmul %5, %6, %cst {dimension_numbers = #tpu.dot_dimension_numbers<[1], [0], [0], [1], [0, 0, 1, 1], [], []>} : vector<8x64xf32>, vector<64x16xf32>, vector<8x16xf32> -> vector<8x16xf32>
    %c8 = arith.constant 8 : index
    %c0_3 = arith.constant 0 : index
    %8 = vector.load %arg0[%c8, %c0_3] : memref<56x1xi32, #tpu.memory_space<vmem>>, vector<8x1xi32>
    %9 = tpu.iota {dimensions = array<i32: 1>} : vector<8x64xi32>
    %10 = vector.broadcast %8 : vector<8x1xi32> to vector<8x64xi32>
    %11 = arith.cmpi eq, %9, %10 : vector<8x64xi32>
    %12 = arith.extui %11 : vector<8x64xi1> to vector<8x64xi32>
    %13 = arith.sitofp %12 : vector<8x64xi32> to vector<8x64xf32>
    %c0_4 = arith.constant 0 : index
    %c0_5 = arith.constant 0 : index
    %14 = vector.load %arg3[%c0_4, %c0_5] : memref<64x16xf32, #tpu.memory_space<vmem>>, vector<64x16xf32>
    %cst_6 = arith.constant dense<0.000000e+00> : vector<8x16xf32>
    %15 = tpu.matmul %13, %14, %cst_6 {dimension_numbers = #tpu.dot_dimension_numbers<[1], [0], [0], [1], [0, 0, 1, 1], [], []>} : vector<8x64xf32>, vector<64x16xf32>, vector<8x16xf32> -> vector<8x16xf32>
    %c16 = arith.constant 16 : index
    %c0_7 = arith.constant 0 : index
    %16 = vector.load %arg0[%c16, %c0_7] : memref<56x1xi32, #tpu.memory_space<vmem>>, vector<40x1xi32>
    %17 = tpu.iota {dimensions = array<i32: 1>} : vector<40x64xi32>
    %18 = vector.broadcast %16 : vector<40x1xi32> to vector<40x64xi32>
    %19 = arith.cmpi eq, %17, %18 : vector<40x64xi32>
    %20 = arith.extui %19 : vector<40x64xi1> to vector<40x64xi32>
    %21 = arith.sitofp %20 : vector<40x64xi32> to vector<40x64xf32>
    %c0_8 = arith.constant 0 : index
    %c0_9 = arith.constant 0 : index
    %22 = vector.load %arg4[%c0_8, %c0_9] : memref<64x32xf32, #tpu.memory_space<vmem>>, vector<64x32xf32>
    %cst_10 = arith.constant dense<0.000000e+00> : vector<40x32xf32>
    %23 = tpu.matmul %21, %22, %cst_10 {dimension_numbers = #tpu.dot_dimension_numbers<[1], [0], [0], [1], [0, 0, 1, 1], [], []>} : vector<40x64xf32>, vector<64x32xf32>, vector<40x32xf32> -> vector<40x32xf32>
    %c0_11 = arith.constant 0 : index
    %c0_12 = arith.constant 0 : index
    %24 = vector.load %arg5[%c0_11, %c0_12] : memref<32x64xf32, #tpu.memory_space<vmem>>, vector<16x64xf32>
    %cst_13 = arith.constant dense<0.000000e+00> : vector<8x64xf32>
    %25 = tpu.matmul %7, %24, %cst_13 {dimension_numbers = #tpu.dot_dimension_numbers<[1], [0], [0], [1], [0, 0, 1, 1], [], []>} : vector<8x16xf32>, vector<16x64xf32>, vector<8x64xf32> -> vector<8x64xf32>
    %c16_14 = arith.constant 16 : index
    %c0_15 = arith.constant 0 : index
    %26 = vector.load %arg5[%c16_14, %c0_15] : memref<32x64xf32, #tpu.memory_space<vmem>>, vector<16x64xf32>
    %cst_16 = arith.constant dense<0.000000e+00> : vector<8x64xf32>
    %27 = tpu.matmul %15, %26, %cst_16 {dimension_numbers = #tpu.dot_dimension_numbers<[1], [0], [0], [1], [0, 0, 1, 1], [], []>} : vector<8x16xf32>, vector<16x64xf32>, vector<8x64xf32> -> vector<8x64xf32>
    %28 = arith.addf %25, %27 : vector<8x64xf32>
    %c0_17 = arith.constant 0 : index
    %c0_18 = arith.constant 0 : index
    %29 = vector.load %arg6[%c0_17, %c0_18] : memref<1x64xf32, #tpu.memory_space<vmem>>, vector<1x64xf32>
    %30 = vector.broadcast %29 : vector<1x64xf32> to vector<8x64xf32>
    %31 = arith.addf %28, %30 : vector<8x64xf32>
    %cst_19 = arith.constant 0.000000e+00 : f32
    %32 = vector.broadcast %cst_19 : f32 to vector<8x64xf32>
    %33 = arith.maximumf %31, %32 : vector<8x64xf32>
    %c0_20 = arith.constant 0 : index
    %c0_21 = arith.constant 0 : index
    %34 = vector.load %arg7[%c0_20, %c0_21] : memref<64x32xf32, #tpu.memory_space<vmem>>, vector<64x32xf32>
    %cst_22 = arith.constant dense<0.000000e+00> : vector<8x32xf32>
    %35 = tpu.matmul %33, %34, %cst_22 {dimension_numbers = #tpu.dot_dimension_numbers<[1], [0], [0], [1], [0, 0, 1, 1], [], []>} : vector<8x64xf32>, vector<64x32xf32>, vector<8x32xf32> -> vector<8x32xf32>
    %c0_23 = arith.constant 0 : index
    %c0_24 = arith.constant 0 : index
    %36 = vector.load %arg8[%c0_23, %c0_24] : memref<1x32xf32, #tpu.memory_space<vmem>>, vector<1x32xf32>
    %37 = vector.broadcast %36 : vector<1x32xf32> to vector<8x32xf32>
    %38 = arith.addf %35, %37 : vector<8x32xf32>
    %cst_25 = arith.constant dense<0.000000e+00> : vector<8x40xf32>
    %39 = tpu.matmul %38, %23, %cst_25 {dimension_numbers = #tpu.dot_dimension_numbers<[1], [1], [0], [0], [0, 0, 1, 0], [], []>} : vector<8x32xf32>, vector<40x32xf32>, vector<8x40xf32> -> vector<8x40xf32>
    %cst_26 = arith.constant 1.000000e+00 : f32
    %40 = vector.broadcast %cst_26 : f32 to vector<8x40xf32>
    %41 = arith.mulf %39, %40 : vector<8x40xf32>
    %cst_27 = arith.constant -1.000000e+01 : f32
    %cst_28 = arith.constant 1.000000e+01 : f32
    %42 = vector.broadcast %cst_27 : f32 to vector<8x40xf32>
    %43 = arith.maximumf %42, %41 : vector<8x40xf32>
    %44 = vector.broadcast %cst_28 : f32 to vector<8x40xf32>
    %45 = arith.minimumf %44, %43 : vector<8x40xf32>
    %c0_29 = arith.constant 0 : index
    %c0_30 = arith.constant 0 : index
    %46 = vector.load %arg1[%c0_29, %c0_30] : memref<8x40xf32, #tpu.memory_space<vmem>>, vector<8x40xf32>
    %47 = arith.mulf %46, %45 : vector<8x40xf32>
    %48 = math.exp %47 : vector<8x40xf32>
    %49 = math.log1p %48 : vector<8x40xf32>
    %cst_31 = arith.constant 0.000000e+00 : f32
    %50 = vector.broadcast %cst_31 : f32 to vector<8x40xf32>
    %51 = arith.cmpf one, %46, %50 : vector<8x40xf32>
    %cst_32 = arith.constant 0.000000e+00 : f32
    %52 = vector.broadcast %cst_32 : f32 to vector<8x40xf32>
    %53 = arith.select %51, %49, %52 : vector<8x40xi1>, vector<8x40xf32>
    %54 = vector.shape_cast %53 : vector<8x40xf32> to vector<1x8x40xf32>
    %cst_33 = arith.constant dense<0.000000e+00> : vector<1xf32>
    %55 = vector.multi_reduction <add>, %54, %cst_33 [1, 2] : vector<1x8x40xf32> to vector<1xf32>
    %56 = vector.shape_cast %55 : vector<1xf32> to vector<1x1x1xf32>
    %57 = vector.extract %56[0, 0, 0] : f32 from vector<1x1x1xf32>
    %cst_34 = arith.constant 1.250000e-01 : f32
    %58 = arith.mulf %57, %cst_34 : f32
    %c0_35 = arith.constant 0 : index
    %c0_36 = arith.constant 0 : index
    %59 = memref.load %arg9[%c0_35, %c0_36] : memref<1x1xf32, #tpu.memory_space<smem>>
    memref.store %58, %arg9[%c0_35, %c0_36] : memref<1x1xf32, #tpu.memory_space<smem>>
    return
  }
}

</mosaic_0001>

<llo_original>
// kernel: onetower_forward.1
$region0: #{onetower_forward.1}
  #allocation0 [shape = 'u32[]', space=smem, size = 0x4, offset = 0x4, fixed_abs, tag = 'smem constant byte address 0x4 - core index']
  #allocation1 [shape = 'u32[72,128]{1,0:T(1,128)}', space=vmem, size = 0x9000, scoped, tag = 'internal scratch']
  %s0 = inlined_call_operand.vmem [shape: s32[56,1], index: 0, kind: input, shape index: {}]
  %s1 = inlined_call_operand.vmem [shape: f32[8,40], index: 1, kind: input, shape index: {}]
  %s2 = inlined_call_operand.vmem [shape: f32[64,16], index: 2, kind: input, shape index: {}]
  %s3 = inlined_call_operand.vmem [shape: f32[64,16], index: 3, kind: input, shape index: {}]
  %s4 = inlined_call_operand.vmem [shape: f32[64,32], index: 4, kind: input, shape index: {}]
  %s5 = inlined_call_operand.vmem [shape: f32[32,64], index: 5, kind: input, shape index: {}]
  %s6 = inlined_call_operand.vmem [shape: f32[1,64], index: 6, kind: input, shape index: {}]
  %s7 = inlined_call_operand.vmem [shape: f32[64,32], index: 7, kind: input, shape index: {}]
  %s8 = inlined_call_operand.vmem [shape: f32[1,32], index: 8, kind: input, shape index: {}]
  %s9 = inlined_call_operand.hbm [shape: f32[1,1], index: 9, kind: output, shape index: {}]
  %s10 = sld [smem:[#allocation0]]
  $region46: #{onetower_forward.1} parent=0
    _
  %s12 = ssub.s32 1, %s10
  %s13 = scalar_select 0, %s12, %s10
  $region1: #{onetower_forward.1} parent=0
    #allocation2 [shape = 'u8[512]{0}', space=smem, size = 0x200, scoped, tag = 'output window, operand 0, single buffered']
    #allocation3 [shape = 's32[1]{0}', space=sflag, size = 0x4, scoped, tag = 'scoped memory for onetower_forward.1']
    %14 = vsyncpa [#allocation3], 0
    // Predicated region
    $region2: #{onetower_forward.1} parent=1 // pred_check
      _
    $region3: #{onetower_forward.1} parent=1 // pred_check_branch
      %16 = sbr.rel (0) target = $region5
    $region4: #{onetower_forward.1} parent=1 // pred_region
      _
    $region5: #{onetower_forward.1} parent=1 // pred_fallthru
      _
    // Predicated region
    $region6: #{onetower_forward.1} parent=1 // pred_check
      _
    $region7: #{onetower_forward.1} parent=1 // pred_check_branch
      %18 = sbr.rel (0) target = $region9
    $region8: #{onetower_forward.1} parent=1 // pred_region
      _
    $region9: #{onetower_forward.1} parent=1 // pred_fallthru
      _
    // Predicated region
    $region10: #{onetower_forward.1} parent=1 // pred_check
      _
    $region11: #{onetower_forward.1} parent=1 // pred_check_branch
      %20 = sbr.rel (0) target = $region13
    $region12: #{onetower_forward.1} parent=1 // pred_region
      _
    $region13: #{onetower_forward.1} parent=1 // pred_fallthru
      _
    // Predicated region
    $region14: #{onetower_forward.1} parent=1 // pred_check
      _
    $region15: #{onetower_forward.1} parent=1 // pred_check_branch
      %22 = sbr.rel (0) target = $region17
    $region16: #{onetower_forward.1} parent=1 // pred_region
      _
    $region17: #{onetower_forward.1} parent=1 // pred_fallthru
      _
    // Predicated region
    $region18: #{onetower_forward.1} parent=1 // pred_check
      _
    $region19: #{onetower_forward.1} parent=1 // pred_check_branch
      %24 = sbr.rel (0) target = $region21
    $region20: #{onetower_forward.1} parent=1 // pred_region
      _
    $region21: #{onetower_forward.1} parent=1 // pred_fallthru
      _
    // Predicated region
    $region22: #{onetower_forward.1} parent=1 // pred_check
      _
    $region23: #{onetower_forward.1} parent=1 // pred_check_branch
      %26 = sbr.rel (0) target = $region25
    $region24: #{onetower_forward.1} parent=1 // pred_region
      _
    $region25: #{onetower_forward.1} parent=1 // pred_fallthru
      _
    // Predicated region
    $region26: #{onetower_forward.1} parent=1 // pred_check
      _
    $region27: #{onetower_forward.1} parent=1 // pred_check_branch
      %28 = sbr.rel (0) target = $region29
    $region28: #{onetower_forward.1} parent=1 // pred_region
      _
    $region29: #{onetower_forward.1} parent=1 // pred_fallthru
      _
    // Predicated region
    $region30: #{onetower_forward.1} parent=1 // pred_check
      _
    $region31: #{onetower_forward.1} parent=1 // pred_check_branch
      %30 = sbr.rel (0) target = $region33
    $region32: #{onetower_forward.1} parent=1 // pred_region
      _
    $region33: #{onetower_forward.1} parent=1 // pred_fallthru
      _
    // Predicated region
    $region34: #{onetower_forward.1} parent=1 // pred_check
      _
    $region35: #{onetower_forward.1} parent=1 // pred_check_branch
      %32 = sbr.rel (0) target = $region37
    $region36: #{onetower_forward.1} parent=1 // pred_region
      _
    $region37: #{onetower_forward.1} parent=1 // pred_fallthru
      _
    %v33 = vld [vmem:[%s0] sm:$0xff]
    %v34 = vlaneseq
    %v35 = vand.u32 %v34, 127
    %36 = vset.pattern.permute.xlu0 0
    %37 = vperm.xlu0 %36, %v33
    %v38 = vpop.permute.xlu0 %37
    %vm39 = vcmp.eq.s32.totalorder %v35, %v38
    %v40 = vsel %vm39, 1, 0
    %v41 = vcvt.s32.f32 %v40
    %v42 = vld [vmem:[%s2] sm:$0xff]
    %v43 = vld [vmem:[%s2 + $0x8] sm:$0xff]
    %v44 = vld [vmem:[%s2 + $0x10] sm:$0xff]
    %v45 = vld [vmem:[%s2 + $0x18] sm:$0xff]
    %v46 = vld [vmem:[%s2 + $0x20] sm:$0xff]
    %v47 = vld [vmem:[%s2 + $0x28] sm:$0xff]
    %v48 = vld [vmem:[%s2 + $0x30] sm:$0xff]
    %v49 = vld [vmem:[%s2 + $0x38] sm:$0xff]
    %vm50 = vcmask 523264
    %v52 = vsel %vm50, %v41, 0
    %54 = vmatpush.msra.mxu0 0.0
    %55 = vmatpush.msra.mxu0 0.0
    %56 = vmatpush.msra.mxu0 0.0
    %57 = vmatpush.msra.mxu0 0.0
    %58 = vmatpush.msra.mxu0 0.0
    %59 = vmatpush.msra.mxu0 0.0
    %60 = vmatpush.msra.mxu0 0.0
    %61 = vmatpush.msra.mxu0 0.0
    %62 = vmatpush.msra.mxu0 %v49
    %63 = vmatpush.msra.mxu0 %v48
    %64 = vmatpush.msra.mxu0 %v47
    %65 = vmatpush.msra.mxu0 %v46
    %66 = vmatpush.msra.mxu0 %v45
    %67 = vmatpush.msra.mxu0 %v44
    %68 = vmatpush.msra.mxu0 %v43
    %69 = vmatpush.msra.mxu0 %v42
    %70 = vmatmul.f32.gmra.mxu0 %v52
    %v71 = vpop.f32.mrf.mxu0
    %v72 = vadd.f32 0.0, %v71
    %73 = vdwg.mxu0
    %v74 = vld [vmem:[%s0 + $0x8] sm:$0xff]
    %75 = vset.pattern.permute.xlu0 0
    %76 = vperm.xlu0 %75, %v74
    %v77 = vpop.permute.xlu0 %76
    %vm78 = vcmp.eq.s32.totalorder %v35, %v77
    %v79 = vsel %vm78, 1, 0
    %v80 = vcvt.s32.f32 %v79
    %v81 = vld [vmem:[%s3] sm:$0xff]
    %v82 = vld [vmem:[%s3 + $0x8] sm:$0xff]
    %v83 = vld [vmem:[%s3 + $0x10] sm:$0xff]
    %v84 = vld [vmem:[%s3 + $0x18] sm:$0xff]
    %v85 = vld [vmem:[%s3 + $0x20] sm:$0xff]
    %v86 = vld [vmem:[%s3 + $0x28] sm:$0xff]
    %v87 = vld [vmem:[%s3 + $0x30] sm:$0xff]
    %v88 = vld [vmem:[%s3 + $0x38] sm:$0xff]
    %v90 = vsel %vm50, %v80, 0
    %92 = vmatpush.msra.mxu0 0.0
    %93 = vmatpush.msra.mxu0 0.0
    %94 = vmatpush.msra.mxu0 0.0
    %95 = vmatpush.msra.mxu0 0.0
    %96 = vmatpush.msra.mxu0 0.0
    %97 = vmatpush.msra.mxu0 0.0
    %98 = vmatpush.msra.mxu0 0.0
    %99 = vmatpush.msra.mxu0 0.0
    %100 = vmatpush.msra.mxu0 %v88
    %101 = vmatpush.msra.mxu0 %v87
    %102 = vmatpush.msra.mxu0 %v86
    %103 = vmatpush.msra.mxu0 %v85
    %104 = vmatpush.msra.mxu0 %v84
    %105 = vmatpush.msra.mxu0 %v83
    %106 = vmatpush.msra.mxu0 %v82
    %107 = vmatpush.msra.mxu0 %v81
    %108 = vmatmul.f32.gmra.mxu0 %v90
    %v109 = vpop.f32.mrf.mxu0
    %v110 = vadd.f32 0.0, %v109
    %111 = vdwg.mxu0
    %v112 = vld [vmem:[%s0 + $0x10] sm:$0xff]
    %v113 = vld [vmem:[%s0 + $0x18] sm:$0xff]
    %v114 = vld [vmem:[%s0 + $0x20] sm:$0xff]
    %v115 = vld [vmem:[%s0 + $0x28] sm:$0xff]
    %v116 = vld [vmem:[%s0 + $0x30] sm:$0xff]
    %117 = vset.pattern.permute.xlu0 0
    %118 = vperm.xlu0 %117, %v112
    %v119 = vpop.permute.xlu0 %118
    %120 = vset.pattern.permute.xlu0 0
    %121 = vperm.xlu0 %120, %v113
    %v122 = vpop.permute.xlu0 %121
    %123 = vset.pattern.permute.xlu0 0
    %124 = vperm.xlu0 %123, %v114
    %v125 = vpop.permute.xlu0 %124
    %126 = vset.pattern.permute.xlu0 0
    %127 = vperm.xlu0 %126, %v115
    %v128 = vpop.permute.xlu0 %127
    %129 = vset.pattern.permute.xlu0 0
    %130 = vperm.xlu0 %129, %v116
    %v131 = vpop.permute.xlu0 %130
    %vm132 = vcmp.eq.s32.totalorder %v35, %v119
    %vm133 = vcmp.eq.s32.totalorder %v35, %v122
    %vm134 = vcmp.eq.s32.totalorder %v35, %v125
    %vm135 = vcmp.eq.s32.totalorder %v35, %v128
    %vm136 = vcmp.eq.s32.totalorder %v35, %v131
    %v137 = vsel %vm132, 1, 0
    %v138 = vsel %vm133, 1, 0
    %v139 = vsel %vm134, 1, 0
    %v140 = vsel %vm135, 1, 0
    %v141 = vsel %vm136, 1, 0
    %v142 = vcvt.s32.f32 %v137
    %v143 = vcvt.s32.f32 %v138
    %v144 = vcvt.s32.f32 %v139
    %v145 = vcvt.s32.f32 %v140
    %v146 = vcvt.s32.f32 %v141
    %v147 = vld [vmem:[%s4] sm:$0xff]
    %v148 = vld [vmem:[%s4 + $0x8] sm:$0xff]
    %v149 = vld [vmem:[%s4 + $0x10] sm:$0xff]
    %v150 = vld [vmem:[%s4 + $0x18] sm:$0xff]
    %v151 = vld [vmem:[%s4 + $0x20] sm:$0xff]
    %v152 = vld [vmem:[%s4 + $0x28] sm:$0xff]
    %v153 = vld [vmem:[%s4 + $0x30] sm:$0xff]
    %v154 = vld [vmem:[%s4 + $0x38] sm:$0xff]
    %v156 = vsel %vm50, %v142, 0
    %v159 = vsel %vm50, %v143, 0
    %v162 = vsel %vm50, %v144, 0
    %v165 = vsel %vm50, %v145, 0
    %v168 = vsel %vm50, %v146, 0
    %170 = vmatpush.msra.mxu0 0.0
    %171 = vmatpush.msra.mxu0 0.0
    %172 = vmatpush.msra.mxu0 0.0
    %173 = vmatpush.msra.mxu0 0.0
    %174 = vmatpush.msra.mxu0 0.0
    %175 = vmatpush.msra.mxu0 0.0
    %176 = vmatpush.msra.mxu0 0.0
    %177 = vmatpush.msra.mxu0 0.0
    %178 = vmatpush.msra.mxu0 %v154
    %179 = vmatpush.msra.mxu0 %v153
    %180 = vmatpush.msra.mxu0 %v152
    %181 = vmatpush.msra.mxu0 %v151
    %182 = vmatpush.msra.mxu0 %v150
    %183 = vmatpush.msra.mxu0 %v149
    %184 = vmatpush.msra.mxu0 %v148
    %185 = vmatpush.msra.mxu0 %v147
    %186 = vmatmul.f32.gmra.mxu0 %v156
    %v187 = vpop.f32.mrf.mxu0
    %v188 = vadd.f32 0.0, %v187
    %189 = vmatmul.f32.gmra.mxu0 %v159
    %v190 = vpop.f32.mrf.mxu0
    %v191 = vadd.f32 0.0, %v190
    %192 = vmatmul.f32.gmra.mxu0 %v162
    %v193 = vpop.f32.mrf.mxu0
    %v194 = vadd.f32 0.0, %v193
    %195 = vmatmul.f32.gmra.mxu0 %v165
    %v196 = vpop.f32.mrf.mxu0
    %v197 = vadd.f32 0.0, %v196
    %198 = vmatmul.f32.gmra.mxu0 %v168
    %v199 = vpop.f32.mrf.mxu0
    %v200 = vadd.f32 0.0, %v199
    %201 = vdwg.mxu0
    %v202 = vld [vmem:[%s5] sm:$0xff]
    %v203 = vld [vmem:[%s5 + $0x8] sm:$0xff]
    %v204 = vld [vmem:[%s5 + $0x10] sm:$0xff]
    %v205 = vld [vmem:[%s5 + $0x18] sm:$0xff]
    %vm206 = vcmask 130048
    %v208 = vsel %vm206, %v110, 0
    %210 = vmatpush.msra.mxu0 0.0
    %211 = vmatpush.msra.mxu0 0.0
    %212 = vmatpush.msra.mxu0 0.0
    %213 = vmatpush.msra.mxu0 0.0
    %214 = vmatpush.msra.mxu0 0.0
    %215 = vmatpush.msra.mxu0 0.0
    %216 = vmatpush.msra.mxu0 0.0
    %217 = vmatpush.msra.mxu0 0.0
    %218 = vmatpush.msra.mxu0 0.0
    %219 = vmatpush.msra.mxu0 0.0
    %220 = vmatpush.msra.mxu0 0.0
    %221 = vmatpush.msra.mxu0 0.0
    %222 = vmatpush.msra.mxu0 0.0
    %223 = vmatpush.msra.mxu0 0.0
    %224 = vmatpush.msra.mxu0 %v205
    %225 = vmatpush.msra.mxu0 %v204
    %226 = vmatmul.f32.gmra.mxu0 %v208
    %v227 = vpop.f32.mrf.mxu0
    %v228 = vadd.f32 0.0, %v227
    %229 = vdwg.mxu0
    %v231 = vsel %vm206, %v72, 0
    %233 = vmatpush.msra.mxu0 0.0
    %234 = vmatpush.msra.mxu0 0.0
    %235 = vmatpush.msra.mxu0 0.0
    %236 = vmatpush.msra.mxu0 0.0
    %237 = vmatpush.msra.mxu0 0.0
    %238 = vmatpush.msra.mxu0 0.0
    %239 = vmatpush.msra.mxu0 0.0
    %240 = vmatpush.msra.mxu0 0.0
    %241 = vmatpush.msra.mxu0 0.0
    %242 = vmatpush.msra.mxu0 0.0
    %243 = vmatpush.msra.mxu0 0.0
    %244 = vmatpush.msra.mxu0 0.0
    %245 = vmatpush.msra.mxu0 0.0
    %246 = vmatpush.msra.mxu0 0.0
    %247 = vmatpush.msra.mxu0 %v203
    %248 = vmatpush.msra.mxu0 %v202
    %249 = vmatmul.f32.gmra.mxu0 %v231
    %v250 = vpop.f32.mrf.mxu0
    %v251 = vadd.f32 %v228, %v250
    %252 = vdwg.mxu0
    %v253 = vld [vmem:[%s6] sm:$0x1]
    %v255 = vperm.slane %v253, 0
    %v257 = vadd.f32 %v251, %v255
    %v258 = vmax.f32 %v257, 0.0
    %v259 = vld [vmem:[%s7] sm:$0xff]
    %v260 = vld [vmem:[%s7 + $0x8] sm:$0xff]
    %v261 = vld [vmem:[%s7 + $0x10] sm:$0xff]
    %v262 = vld [vmem:[%s7 + $0x18] sm:$0xff]
    %v263 = vld [vmem:[%s7 + $0x20] sm:$0xff]
    %v264 = vld [vmem:[%s7 + $0x28] sm:$0xff]
    %v265 = vld [vmem:[%s7 + $0x30] sm:$0xff]
    %v266 = vld [vmem:[%s7 + $0x38] sm:$0xff]
    %v267 = vld [vmem:[%s8] sm:$0x1]
    %v269 = vperm.slane %v267, 0
    %v272 = vsel %vm50, %v258, 0
    %274 = vmatpush.msra.mxu0 0.0
    %275 = vmatpush.msra.mxu0 0.0
    %276 = vmatpush.msra.mxu0 0.0
    %277 = vmatpush.msra.mxu0 0.0
    %278 = vmatpush.msra.mxu0 0.0
    %279 = vmatpush.msra.mxu0 0.0
    %280 = vmatpush.msra.mxu0 0.0
    %281 = vmatpush.msra.mxu0 0.0
    %282 = vmatpush.msra.mxu0 %v266
    %283 = vmatpush.msra.mxu0 %v265
    %284 = vmatpush.msra.mxu0 %v264
    %285 = vmatpush.msra.mxu0 %v263
    %286 = vmatpush.msra.mxu0 %v262
    %287 = vmatpush.msra.mxu0 %v261
    %288 = vmatpush.msra.mxu0 %v260
    %289 = vmatpush.msra.mxu0 %v259
    %290 = vmatmul.f32.gmra.mxu0 %v272
    %v291 = vpop.f32.mrf.mxu0
    %v292 = vadd.f32 %v269, %v291
    %293 = vdwg.mxu0
    %vm294 = vcmask 261120
    %v296 = vsel %vm294, %v292, 0
    %v299 = vsel %vm294, %v188, 0
    %v302 = vsel %vm294, %v191, 0
    %v305 = vsel %vm294, %v194, 0
    %v308 = vsel %vm294, %v197, 0
    %v311 = vsel %vm294, %v200, 0
    %313 = vmatpush.xpose.msra.mxu0 0.0
    %314 = vmatpush.xpose.msra.mxu0 0.0
    %315 = vmatpush.xpose.msra.mxu0 0.0
    %316 = vmatpush.xpose.msra.mxu0 0.0
    %317 = vmatpush.xpose.msra.mxu0 0.0
    %318 = vmatpush.xpose.msra.mxu0 0.0
    %319 = vmatpush.xpose.msra.mxu0 0.0
    %320 = vmatpush.xpose.msra.mxu0 0.0
    %321 = vmatpush.xpose.msra.mxu0 0.0
    %322 = vmatpush.xpose.msra.mxu0 0.0
    %323 = vmatpush.xpose.msra.mxu0 0.0
    %324 = vmatpush.xpose.msra.mxu0 %v311
    %325 = vmatpush.xpose.msra.mxu0 %v308
    %326 = vmatpush.xpose.msra.mxu0 %v305
    %327 = vmatpush.xpose.msra.mxu0 %v302
    %328 = vmatpush.xpose.msra.mxu0 %v299
    %329 = vmatmul.f32.gmra.mxu0 %v296
    %v330 = vpop.f32.mrf.mxu0
    %v331 = vadd.f32 0.0, %v330
    %332 = vdwg.mxu0
    %v333 = vmax.f32 %v331, -10.0
    %v334 = vmin.f32 %v333, 10.0
    %v335 = vld [vmem:[%s1] sm:$0xff]
    %v336 = vmul.f32 %v335, %v334
    %v337 = vmul.f32 %v336, 1.442695
    %v338 = vpow.pop %v337
    %v339 = vadd.f32 %v338, 1.0
    %v340 = vlog2.pop %v339
    %v341 = vmul.f32 %v340, 0.6931472
    %v342 = vmul.f32 -0.5, %v338
    %v343 = vadd.f32 %v342, 1.0
    %v344 = vmul.f32 %v343, %v338
    %v345 = vand.u32 2147483647, %v338
    %vm346 = vcmp.lt.f32.partialorder %v345, 0.0004427343
    %v347 = vsel %vm346, %v344, %v341
    %vm348 = vcmp.ne.f32.partialorder %v335, 0.0
    %v349 = vsel %vm348, %v347, 0.0
    %vm350 = vcmask 326656
    %v351 = vsel %vm350, %v349, 0.0
    %352 = vadd.xlane.f32.xlu0 %v351
    %v353 = vpop.xlane.xlu0 %352
    %v354 = vrot.slane %v353, 4
    %v355 = vadd.f32 %v353, %v354
    %v356 = vrot.slane %v355, 2
    %v357 = vadd.f32 %v355, %v356
    %v358 = vrot.slane %v357, 1
    %v359 = vadd.f32 %v357, %v358
    %s360 = vtos %v359
    %s361 = smul.f32 %s360, 0.125
    %s362 = scalar_lea.smem [#allocation2], 0
    %363 = sst [smem:[%s362]] %s361
    // Predicated region
    $region38: #{onetower_forward.1} parent=1 // pred_check
      _
    $region39: #{onetower_forward.1} parent=1 // pred_check_branch
      %365 = sbr.rel (0) target = $region41
    $region40: #{onetower_forward.1} parent=1 // pred_region
      %367 = vsyncadd [#allocation3], 0
      %s369 = sshll.u32 %s9, 4
      %s370 = int_to_ptr.hbm [resolvable:$true] %s369
      %372 = dma.smem_to_hbm [#allocation2], 16, %s370, [#allocation3]
    $region41: #{onetower_forward.1} parent=1 // pred_fallthru
      _
    // Predicated region
    $region42: #{onetower_forward.1} parent=1 // pred_check
      _
    $region43: #{onetower_forward.1} parent=1 // pred_check_branch
      %374 = sbr.rel (0) target = $region45
    $region44: #{onetower_forward.1} parent=1 // pred_region
      %376 = dma.done [#allocation3], 16
    $region45: #{onetower_forward.1} parent=1 // pred_fallthru
      _
    %377 = sfence
    %378 = vsyncpa [#allocation3], 1

</llo_original>
